<compile_context>
chip_gen: v6e
topology: v6e:2x2x1
jax: 0.10.0
libtpu: 0.0.40
codegen_flags: <defaults>
</compile_context>

<pallas_src>
import functools

import jax
import jax.numpy as jnp
from jax import lax
from jax.experimental import pallas as pl
from jax.experimental.pallas import tpu as pltpu

_LANE = 128
_SUBLANE = 8
_GATHER_GROUP = 32          # rows gathered per grid step on the DMA path
_SMALL_SLAB_BYTES = 2 << 20  # always-resident threshold for the VMEM path


def _round_up(x, m):
    return ((x + m - 1) // m) * m


def _vmem_capacity_bytes():
    try:
        info = pltpu.get_tpu_info()
        cap = getattr(info, "vmem_capacity_bytes", None)
        if cap:
            return int(cap)
    except Exception:
        pass
    return 64 * 1024 * 1024  # conservative default (v7x per-TC VMEM)


def _pack_dataset(points, colours):
    """Pack points [N, D] and colours [N, C] into one lane-padded slab.

    Layout: row = [ points (D) | colours (C) | pad up to round_up(D+C,128) ].
    """
    n, d = points.shape
    _, c = colours.shape
    w = _round_up(d + c, _LANE)
    n_pad = _round_up(n, _SUBLANE)
    # TODO(synk): colours are stored in points.dtype inside the slab; they are
    # cast back to their original dtype on return (lossless for uint8->f32).
    packed = jnp.zeros((n_pad, w), dtype=points.dtype)
    packed = packed.at[:n, :d].set(points)
    packed = packed.at[:n, d:d + c].set(colours.astype(points.dtype))
    return packed


# --------------------------------------------------------------------------
# VMEM-resident path: copy the whole slab HBM->VMEM once (1x buffered), then
# gather rows with 8-row grouped stores into out_ref.
# --------------------------------------------------------------------------
def _vmem_gather_kernel(idx_ref, data_hbm, out_ref, slab, group, sem):
    cp = pltpu.make_async_copy(data_hbm, slab, sem)
    cp.start()
    cp.wait()

    n_groups = out_ref.shape[0] // _SUBLANE

    def body(gi, carry):
        base = pl.multiple_of(gi * _SUBLANE, _SUBLANE)
        # Gather 8 rows into the (8, W) group scratch, then emit one
        # unmasked (8, W) store to out_ref.
        for j in range(_SUBLANE):  # static unroll
            row = idx_ref[base + j]
            group[pl.ds(j, 1), :] = slab[pl.ds(row, 1), :]
        out_ref[pl.ds(base, _SUBLANE), :] = group[...]
        return carry

    lax.fori_loop(0, n_groups, body, 0, unroll=(n_groups <= 8))


# --------------------------------------------------------------------------
# HBM DMA-gather path: G concurrent row DMAs straight into out_ref per step.
# --------------------------------------------------------------------------
def _dma_gather_kernel(idx_ref, data_hbm, out_ref, sems):
    g = out_ref.shape[0]
    base = pl.program_id(0) * g

    def start(j, carry):
        row = idx_ref[base + j]
        pltpu.make_async_copy(data_hbm.at[row], out_ref.at[j], sems.at[j]).start()
        return carry

    lax.fori_loop(0, g, start, 0, unroll=True)

    def wait(j, carry):
        # Rebuild the same descriptor (same src row / dst / semaphore) to wait.
        row = idx_ref[base + j]
        pltpu.make_async_copy(data_hbm.at[row], out_ref.at[j], sems.at[j]).wait()
        return carry

    lax.fori_loop(0, g, wait, 0, unroll=True)


@functools.partial(jax.jit, static_argnames=("n", "d", "c", "use_vmem"))
def _gather_packed(indices, packed, *, n, d, c, use_vmem):
    b = indices.shape[0]
    n_pad, w = packed.shape
    itemsize = jnp.dtype(packed.dtype).itemsize
    # Bounds safety: clamp indices to valid dataset rows.
    idx = jnp.clip(indices.astype(jnp.int32), 0, n - 1)

    if use_vmem:
        b_pad = _round_up(b, _SUBLANE)
        if b_pad != b:
            idx = jnp.pad(idx, (0, b_pad - b))  # pad with valid row 0
        slab_bytes = n_pad * w * itemsize
        out_bytes = b_pad * w * itemsize
        # 1x slab (manual copy, no double buffering) + 2x output block
        # (pipeline double-buffer) + group scratch + headroom.
        needed = (slab_bytes + 2 * out_bytes
                  + _SUBLANE * w * itemsize + (4 << 20))
        vmem_limit = int(min(_vmem_capacity_bytes(), max(needed, 32 << 20)))
        out = pl.pallas_call(
            _vmem_gather_kernel,
            out_shape=jax.ShapeDtypeStruct((b_pad, w), packed.dtype),
            grid_spec=pltpu.PrefetchScalarGridSpec(
                num_scalar_prefetch=1,
                grid=(1,),
                in_specs=[pl.BlockSpec(memory_space=pl.ANY)],
                out_specs=pl.BlockSpec((b_pad, w), lambda i, idx_ref: (0, 0)),
                scratch_shapes=[
                    pltpu.VMEM((n_pad, w), packed.dtype),      # resident slab
                    pltpu.VMEM((_SUBLANE, w), packed.dtype),   # 8-row group
                    pltpu.SemaphoreType.DMA(()),
                ],
            ),
            compiler_params=pltpu.CompilerParams(
                dimension_semantics=("arbitrary",),
                vmem_limit_bytes=vmem_limit),
            cost_estimate=pl.CostEstimate(
                flops=0, transcendentals=0,
                bytes_accessed=int(slab_bytes + out_bytes)),
        )(idx, packed)
        out = out[:b]
    else:
        g = min(_GATHER_GROUP, _round_up(b, _SUBLANE))
        b_pad = _round_up(b, g)
        if b_pad != b:
            idx = jnp.pad(idx, (0, b_pad - b))  # pad with valid row 0
        out = pl.pallas_call(
            _dma_gather_kernel,
            out_shape=jax.ShapeDtypeStruct((b_pad, w), packed.dtype),
            grid_spec=pltpu.PrefetchScalarGridSpec(
                num_scalar_prefetch=1,
                grid=(b_pad // g,),
                in_specs=[pl.BlockSpec(memory_space=pl.ANY)],
                out_specs=pl.BlockSpec((g, w), lambda s, idx_ref: (s, 0)),
                scratch_shapes=[pltpu.SemaphoreType.DMA((g,))],
            ),
            compiler_params=pltpu.CompilerParams(
                dimension_semantics=("parallel",)),
            cost_estimate=pl.CostEstimate(
                flops=0, transcendentals=0,
                bytes_accessed=int(2 * b_pad * w * itemsize)),
        )(idx, packed)
        out = out[:b]

    points = out[:, :d]
    colours = out[:, d:d + c]
    return points, colours


class PallasSampler:
    """Minimal JAX port of the abstract Sampler base class."""

    def __init__(self, points_dataset, colours_dataset):
        self._N = int(points_dataset.shape[0])
        self._D = int(points_dataset.shape[1])
        self._C = int(colours_dataset.shape[1])
        self._points_dtype = points_dataset.dtype
        self._colours_dtype = colours_dataset.dtype
        # Pack / lane-pad the dataset once, hoisted out of the per-call path.
        self._packed = _pack_dataset(points_dataset, colours_dataset)
        self._epoch_done = True
        self._current_index = 0
        self._current_x_batch = []

    @property
    def epoch_done(self):
        return self._epoch_done

    def reset_epoch(self):
        self._epoch_done = False
        self._current_index = 0
        self._current_x_batch = []

    def _should_use_vmem(self, b):
        """Decide by bytes actually moved per call, not by 'fits in VMEM'."""
        itemsize = jnp.dtype(self._packed.dtype).itemsize
        n_pad, w = self._packed.shape
        slab_bytes = n_pad * w * itemsize
        gather_bytes = b * w * itemsize
        fits = (slab_bytes + 2 * _round_up(b, _SUBLANE) * w * itemsize
                + (8 << 20)) <= int(0.9 * _vmem_capacity_bytes())
        # Resident path only when the slab is tiny or the gathered bytes are
        # at least as large as streaming the slab once.
        return fits and (slab_bytes <= max(_SMALL_SLAB_BYTES, gather_bytes))

    def get_points_from_indices(self, indices, *, force_dma_path=False):
        b = int(indices.shape[0])
        use_vmem = (not force_dma_path) and self._should_use_vmem(b)
        points, colours = _gather_packed(
            indices, self._packed,
            n=self._N, d=self._D, c=self._C, use_vmem=use_vmem)
        return points, colours.astype(self._colours_dtype)

    # TODO(synk): forward() is abstract in the PyTorch module (raises
    # NotImplementedError); no concrete sampling strategy to translate.


if __name__ == "__main__":
    key = jax.random.PRNGKey(0)
    k_pts, k_col, k_idx, k_idx2, k_idx3 = jax.random.split(key, 5)

    N, D, C, B = 64, 128, 3, 8  # dataset size, point dim, colour dim, batch
    points_dataset = jax.random.normal(k_pts, (N, D), dtype=jnp.float32)
    colours_dataset = jax.random.uniform(k_col, (N, C), dtype=jnp.float32)
    indices = jax.random.randint(k_idx, (B,), 0, N, dtype=jnp.int32)

    sampler = PallasSampler(points_dataset, colours_dataset)

    # Fast path: tiny packed dataset -> VMEM-resident gather (grouped stores).
    pts, cols = sampler.get_points_from_indices(indices)
    jax.block_until_ready((pts, cols))
    assert pts.shape == (B, D) and cols.shape == (B, C)
    assert jnp.allclose(pts, points_dataset[indices])
    assert jnp.allclose(cols, colours_dataset[indices])

    # DMA path: row DMAs straight from HBM into out_ref; exercises B % G != 0.
    B2 = 10
    indices2 = jax.random.randint(k_idx2, (B2,), 0, N, dtype=jnp.int32)
    pts2, cols2 = sampler.get_points_from_indices(indices2, force_dma_path=True)
    jax.block_until_ready((pts2, cols2))
    assert pts2.shape == (B2, D) and cols2.shape == (B2, C)
    assert jnp.allclose(pts2, points_dataset[indices2])
    assert jnp.allclose(cols2, colours_dataset[indices2])

    # DMA path with multiple (parallel) grid steps: B3 > G -> grid > 1.
    B3 = 70
    indices3 = jax.random.randint(k_idx3, (B3,), 0, N, dtype=jnp.int32)
    pts3, cols3 = sampler.get_points_from_indices(indices3, force_dma_path=True)
    jax.block_until_ready((pts3, cols3))
    assert pts3.shape == (B3, D) and cols3.shape == (B3, C)
    assert jnp.allclose(pts3, points_dataset[indices3])
    assert jnp.allclose(cols3, colours_dataset[indices3])

    print("KERNEL_OK")
</pallas_src>

<mosaic_0001>
module attributes {stable_mosaic.version = 11 : i64} {
  func.func @_vmem_gather_kernel(%arg0: i32, %arg1: memref<8xi32, #tpu.memory_space<smem>>, %arg2: memref<64x256xf32, #tpu.memory_space<any>>, %arg3: memref<8x256xf32, #tpu.memory_space<vmem>>, %arg4: memref<64x256xf32, #tpu.memory_space<vmem>>, %arg5: memref<8x256xf32, #tpu.memory_space<vmem>>, %arg6: memref<!tpu.dma_semaphore, #tpu.memory_space<semaphore_mem>>) attributes {dimension_semantics = [#tpu.dimension_semantics<arbitrary>], iteration_bounds = array<i64: 1>, scalar_prefetch = 1 : i64, scratch_operands = 3 : i64, tpu.core_type = #tpu.core_type<tc>, window_params = [{}, {pipeline_mode = #tpu.pipeline_mode<synchronous>, transform_indices = @transform_1, window_bounds = array<i64: 8, 256>}]} {
    tpu.enqueue_dma source(%arg2 : memref<64x256xf32, #tpu.memory_space<any>>) target(%arg4 : memref<64x256xf32, #tpu.memory_space<vmem>>) target_semaphore(%arg6 : memref<!tpu.dma_semaphore, #tpu.memory_space<semaphore_mem>>)
    tpu.wait_dma2 semaphore(%arg6 : memref<!tpu.dma_semaphore, #tpu.memory_space<semaphore_mem>>) src(%arg2 : memref<64x256xf32, #tpu.memory_space<any>>) dst(%arg4 : memref<64x256xf32, #tpu.memory_space<vmem>>)
    %c0_i32 = arith.constant 0 : i32
    %c8_i32 = arith.constant 8 : i32
    %0 = arith.muli %c0_i32, %c8_i32 : i32
    %1 = tpu.assume_multiple %0, 8 : i32
    %c0_i32_0 = arith.constant 0 : i32
    %2 = arith.addi %1, %c0_i32_0 : i32
    %3 = arith.index_cast %2 : i32 to index
    %4 = memref.load %arg1[%3] : memref<8xi32, #tpu.memory_space<smem>>
    %5 = arith.index_cast %4 : i32 to index
    %c0 = arith.constant 0 : index
    %6 = vector.load %arg4[%5, %c0] : memref<64x256xf32, #tpu.memory_space<vmem>>, vector<1x256xf32>
    %c0_1 = arith.constant 0 : index
    %c0_2 = arith.constant 0 : index
    %7 = vector.load %arg5[%c0_1, %c0_2] : memref<8x256xf32, #tpu.memory_space<vmem>>, vector<1x256xf32>
    tpu.vector_store %arg5[%c0_1, %c0_2], %6 {strides = array<i32>} : memref<8x256xf32, #tpu.memory_space<vmem>>, vector<1x256xf32>,
    %c1_i32 = arith.constant 1 : i32
    %8 = arith.addi %1, %c1_i32 : i32
    %9 = arith.index_cast %8 : i32 to index
    %10 = memref.load %arg1[%9] : memref<8xi32, #tpu.memory_space<smem>>
    %11 = arith.index_cast %10 : i32 to index
    %c0_3 = arith.constant 0 : index
    %12 = vector.load %arg4[%11, %c0_3] : memref<64x256xf32, #tpu.memory_space<vmem>>, vector<1x256xf32>
    %c1 = arith.constant 1 : index
    %c0_4 = arith.constant 0 : index
    %13 = vector.load %arg5[%c1, %c0_4] : memref<8x256xf32, #tpu.memory_space<vmem>>, vector<1x256xf32>
    tpu.vector_store %arg5[%c1, %c0_4], %12 {strides = array<i32>} : memref<8x256xf32, #tpu.memory_space<vmem>>, vector<1x256xf32>,
    %c2_i32 = arith.constant 2 : i32
    %14 = arith.addi %1, %c2_i32 : i32
    %15 = arith.index_cast %14 : i32 to index
    %16 = memref.load %arg1[%15] : memref<8xi32, #tpu.memory_space<smem>>
    %17 = arith.index_cast %16 : i32 to index
    %c0_5 = arith.constant 0 : index
    %18 = vector.load %arg4[%17, %c0_5] : memref<64x256xf32, #tpu.memory_space<vmem>>, vector<1x256xf32>
    %c2 = arith.constant 2 : index
    %c0_6 = arith.constant 0 : index
    %19 = vector.load %arg5[%c2, %c0_6] : memref<8x256xf32, #tpu.memory_space<vmem>>, vector<1x256xf32>
    tpu.vector_store %arg5[%c2, %c0_6], %18 {strides = array<i32>} : memref<8x256xf32, #tpu.memory_space<vmem>>, vector<1x256xf32>,
    %c3_i32 = arith.constant 3 : i32
    %20 = arith.addi %1, %c3_i32 : i32
    %21 = arith.index_cast %20 : i32 to index
    %22 = memref.load %arg1[%21] : memref<8xi32, #tpu.memory_space<smem>>
    %23 = arith.index_cast %22 : i32 to index
    %c0_7 = arith.constant 0 : index
    %24 = vector.load %arg4[%23, %c0_7] : memref<64x256xf32, #tpu.memory_space<vmem>>, vector<1x256xf32>
    %c3 = arith.constant 3 : index
    %c0_8 = arith.constant 0 : index
    %25 = vector.load %arg5[%c3, %c0_8] : memref<8x256xf32, #tpu.memory_space<vmem>>, vector<1x256xf32>
    tpu.vector_store %arg5[%c3, %c0_8], %24 {strides = array<i32>} : memref<8x256xf32, #tpu.memory_space<vmem>>, vector<1x256xf32>,
    %c4_i32 = arith.constant 4 : i32
    %26 = arith.addi %1, %c4_i32 : i32
    %27 = arith.index_cast %26 : i32 to index
    %28 = memref.load %arg1[%27] : memref<8xi32, #tpu.memory_space<smem>>
    %29 = arith.index_cast %28 : i32 to index
    %c0_9 = arith.constant 0 : index
    %30 = vector.load %arg4[%29, %c0_9] : memref<64x256xf32, #tpu.memory_space<vmem>>, vector<1x256xf32>
    %c4 = arith.constant 4 : index
    %c0_10 = arith.constant 0 : index
    %31 = vector.load %arg5[%c4, %c0_10] : memref<8x256xf32, #tpu.memory_space<vmem>>, vector<1x256xf32>
    tpu.vector_store %arg5[%c4, %c0_10], %30 {strides = array<i32>} : memref<8x256xf32, #tpu.memory_space<vmem>>, vector<1x256xf32>,
    %c5_i32 = arith.constant 5 : i32
    %32 = arith.addi %1, %c5_i32 : i32
    %33 = arith.index_cast %32 : i32 to index
    %34 = memref.load %arg1[%33] : memref<8xi32, #tpu.memory_space<smem>>
    %35 = arith.index_cast %34 : i32 to index
    %c0_11 = arith.constant 0 : index
    %36 = vector.load %arg4[%35, %c0_11] : memref<64x256xf32, #tpu.memory_space<vmem>>, vector<1x256xf32>
    %c5 = arith.constant 5 : index
    %c0_12 = arith.constant 0 : index
    %37 = vector.load %arg5[%c5, %c0_12] : memref<8x256xf32, #tpu.memory_space<vmem>>, vector<1x256xf32>
    tpu.vector_store %arg5[%c5, %c0_12], %36 {strides = array<i32>} : memref<8x256xf32, #tpu.memory_space<vmem>>, vector<1x256xf32>,
    %c6_i32 = arith.constant 6 : i32
    %38 = arith.addi %1, %c6_i32 : i32
    %39 = arith.index_cast %38 : i32 to index
    %40 = memref.load %arg1[%39] : memref<8xi32, #tpu.memory_space<smem>>
    %41 = arith.index_cast %40 : i32 to index
    %c0_13 = arith.constant 0 : index
    %42 = vector.load %arg4[%41, %c0_13] : memref<64x256xf32, #tpu.memory_space<vmem>>, vector<1x256xf32>
    %c6 = arith.constant 6 : index
    %c0_14 = arith.constant 0 : index
    %43 = vector.load %arg5[%c6, %c0_14] : memref<8x256xf32, #tpu.memory_space<vmem>>, vector<1x256xf32>
    tpu.vector_store %arg5[%c6, %c0_14], %42 {strides = array<i32>} : memref<8x256xf32, #tpu.memory_space<vmem>>, vector<1x256xf32>,
    %c7_i32 = arith.constant 7 : i32
    %44 = arith.addi %1, %c7_i32 : i32
    %45 = arith.index_cast %44 : i32 to index
    %46 = memref.load %arg1[%45] : memref<8xi32, #tpu.memory_space<smem>>
    %47 = arith.index_cast %46 : i32 to index
    %c0_15 = arith.constant 0 : index
    %48 = vector.load %arg4[%47, %c0_15] : memref<64x256xf32, #tpu.memory_space<vmem>>, vector<1x256xf32>
    %c7 = arith.constant 7 : index
    %c0_16 = arith.constant 0 : index
    %49 = vector.load %arg5[%c7, %c0_16] : memref<8x256xf32, #tpu.memory_space<vmem>>, vector<1x256xf32>
    tpu.vector_store %arg5[%c7, %c0_16], %48 {strides = array<i32>} : memref<8x256xf32, #tpu.memory_space<vmem>>, vector<1x256xf32>,
    %c0_17 = arith.constant 0 : index
    %c0_18 = arith.constant 0 : index
    %50 = vector.load %arg5[%c0_17, %c0_18] : memref<8x256xf32, #tpu.memory_space<vmem>>, vector<8x256xf32>
    %51 = arith.index_cast %1 : i32 to index
    %c0_19 = arith.constant 0 : index
    %52 = vector.load %arg3[%51, %c0_19] : memref<8x256xf32, #tpu.memory_space<vmem>>, vector<8x256xf32>
    tpu.vector_store %arg3[%51, %c0_19], %50 {strides = array<i32>} : memref<8x256xf32, #tpu.memory_space<vmem>>, vector<8x256xf32>,
    %c1_i32_20 = arith.constant 1 : i32
    return
  }
  func.func @transform_1(%arg0: i32, %arg1: memref<8xi32, #tpu.memory_space<smem>>) -> (i32, i32) {
    %c0_i32 = arith.constant 0 : i32
    %c0_i32_0 = arith.constant 0 : i32
    %c0_i32_1 = arith.constant 0 : i32
    return %c0_i32, %c0_i32_0 : i32, i32
  }
}

</mosaic_0001>

<llo_original>
// kernel: _gather_packed.1
$region0: #{_gather_packed.1}
  #allocation0 [shape = 'u32[]', space=smem, size = 0x4, offset = 0x4, fixed_abs, tag = 'smem constant byte address 0x4 - core index']
  #allocation1 [shape = 'u32[144,128]{1,0:T(1,128)}', space=vmem, size = 0x12000, scoped, tag = 'internal scratch']
  #allocation2 [shape = 'f32[64,256]{1,0:T(8,128)}', space=vmem, size = 0x10000, scoped, tag = 'scratch operand']
  #allocation3 [shape = 'f32[8,256]{1,0:T(8,128)}', space=vmem, size = 0x2000, scoped, tag = 'scratch operand']
  #allocation4 [shape = 's32[1]{0}', space=sflag, size = 0x4, scoped, tag = 'scratch operand']
  #allocation5 [shape = 's32[1]{0}', space=sflag, size = 0x4, scoped, tag = 'scoped memory for _gather_packed.1']
  #allocation6 [shape = 'u8[512]{0}', space=smem, size = 0x200, scoped, tag = 'prefetched SMEM operand 0']
  #allocation7 [shape = 's32[]', space=sflag, size = 0x4, offset = 0, fixed_abs, tag = 'sflag constant byte address 0x0 - dummy sync flag']
  #allocation8 [shape = 's32[]', space=sflag, size = 0x4, offset = 0, fixed_abs, tag = 'sflag constant byte address 0x0 - dummy sync flag']
  #allocation9 [shape = 'u32[]', space=smem, size = 0x4, offset = 0x44, fixed_abs, tag = 'smem constant byte address 0x44 - assertion arg 0']
  #allocation10 [shape = 'u32[]', space=smem, size = 0x4, offset = 0x48, fixed_abs, tag = 'smem constant byte address 0x48 - assertion arg 1']
  %s0 = inlined_call_operand.vmem [shape: s32[8], index: 0, kind: input, shape index: {}]
  %s1 = inlined_call_operand.hbm [shape: f32[64,256], index: 1, kind: input, shape index: {}]
  %s2 = inlined_call_operand.vmem [shape: f32[8,256], index: 2, kind: output, shape index: {}]
  %s3 = sld [smem:[#allocation0]]
  $region14: #{_gather_packed.1} parent=0
    _
  %s5 = ssub.s32 1, %s3
  %s6 = scalar_select 0, %s5, %s3
  %s7 = sshll.u32 %s0, 4
  %s8 = int_to_ptr.vmem [resolvable:$true] %s7
  %10 = dma.vmem_to_smem %s8, 16, [#allocation6], [#allocation5]
  %11 = dma.done [#allocation5], 16
  %12 = sfence
  // Predicated region
  $region2: #{_gather_packed.1} parent=0 // pred_check
    _
  $region3: #{_gather_packed.1} parent=0 // pred_check_branch
    %14 = sbr.rel target = $region5
  $region4: #{_gather_packed.1} parent=0 // pred_region
    %15 = sst [smem:[#allocation9]] [#allocation8]
    %16 = sst [smem:[#allocation10]] [#allocation7]
  $region5: #{_gather_packed.1} parent=0 // pred_fallthru
    _
  %18 = shalt.err (0)
  %s20 = sshll.u32 [#allocation2], 4
  %s21 = int_to_ptr.vmem [resolvable:$true] %s20
  %23 = dma.hbm_to_vmem [thread:$0]  %s1, 2048, %s21, [#allocation4]
  %s24 = smul.u32 8, 8
  %s25 = smul.u32 %s24, 2
  %s26 = sshll.u32 %s25, 4
  %27 = dma.done [#allocation4], %s26
  %s28 = sld [smem:[#allocation6]]
  %s29 = sshra.s32 %s28, 3
  %s30 = sand.u32 %s28, 7
  %s31 = sshra.s32 %s28, 3
  %s32 = sand.u32 %s28, 7
  %s33 = smul.u32 %s29, 2
  %s34 = smul.u32 %s33, 8
  %s35 = sadd.s32 %s34, %s32
  %s36 = scalar_lea.vmem [#allocation2], %s35
  %v37 = vld [vmem:[%s36] ss:$8 sm:$0x3]
  %v38 = vlaneseq
  %vm39 = vcmp.ge.s32.totalorder %v38, 0
  %vm40 = vcmp.lt.s32.totalorder %v38, 256
  %vm41 = vmand %vm39, %vm40
  %42 = vst.msk [vmem:[#allocation3] ss:$8 sm:$0x3] %vm41, %v37
  %43 = vst.msk [vmem:[#allocation3] ss:$8 sm:$0x0] %vm41, %v37
  %s44 = sadd.s32 0, 1
  %s45 = sld [smem:[#allocation6 + %s44]]
  %s46 = sshra.s32 %s45, 3
  %s47 = sand.u32 %s45, 7
  %s48 = sshra.s32 %s45, 3
  %s49 = sand.u32 %s45, 7
  %s50 = smul.u32 %s46, 2
  %s51 = smul.u32 %s50, 8
  %s52 = sadd.s32 %s51, %s49
  %s53 = scalar_lea.vmem [#allocation2], %s52
  %v54 = vld [vmem:[%s53] ss:$8 sm:$0x3]
  %s55 = scalar_lea.vmem [#allocation3], 1
  %56 = vst.msk [vmem:[%s55] ss:$8 sm:$0x3] %vm41, %v54
  %57 = vst.msk [vmem:[%s55] ss:$8 sm:$0x0] %vm41, %v54
  %s58 = sadd.s32 0, 2
  %s59 = sld [smem:[#allocation6 + %s58]]
  %s60 = sshra.s32 %s59, 3
  %s61 = sand.u32 %s59, 7
  %s62 = sshra.s32 %s59, 3
  %s63 = sand.u32 %s59, 7
  %s64 = smul.u32 %s60, 2
  %s65 = smul.u32 %s64, 8
  %s66 = sadd.s32 %s65, %s63
  %s67 = scalar_lea.vmem [#allocation2], %s66
  %v68 = vld [vmem:[%s67] ss:$8 sm:$0x3]
  %s69 = scalar_lea.vmem [#allocation3], 2
  %70 = vst.msk [vmem:[%s69] ss:$8 sm:$0x3] %vm41, %v68
  %71 = vst.msk [vmem:[%s69] ss:$8 sm:$0x0] %vm41, %v68
  %s72 = sadd.s32 0, 3
  %s73 = sld [smem:[#allocation6 + %s72]]
  %s74 = sshra.s32 %s73, 3
  %s75 = sand.u32 %s73, 7
  %s76 = sshra.s32 %s73, 3
  %s77 = sand.u32 %s73, 7
  %s78 = smul.u32 %s74, 2
  %s79 = smul.u32 %s78, 8
  %s80 = sadd.s32 %s79, %s77
  %s81 = scalar_lea.vmem [#allocation2], %s80
  %v82 = vld [vmem:[%s81] ss:$8 sm:$0x3]
  %s83 = scalar_lea.vmem [#allocation3], 3
  %84 = vst.msk [vmem:[%s83] ss:$8 sm:$0x3] %vm41, %v82
  %85 = vst.msk [vmem:[%s83] ss:$8 sm:$0x0] %vm41, %v82
  %s86 = sadd.s32 0, 4
  %s87 = sld [smem:[#allocation6 + %s86]]
  %s88 = sshra.s32 %s87, 3
  %s89 = sand.u32 %s87, 7
  %s90 = sshra.s32 %s87, 3
  %s91 = sand.u32 %s87, 7
  %s92 = smul.u32 %s88, 2
  %s93 = smul.u32 %s92, 8
  %s94 = sadd.s32 %s93, %s91
  %s95 = scalar_lea.vmem [#allocation2], %s94
  %v96 = vld [vmem:[%s95] ss:$8 sm:$0x3]
  %s97 = scalar_lea.vmem [#allocation3], 4
  %98 = vst.msk [vmem:[%s97] ss:$8 sm:$0x3] %vm41, %v96
  %99 = vst.msk [vmem:[%s97] ss:$8 sm:$0x0] %vm41, %v96
  %s100 = sadd.s32 0, 5
  %s101 = sld [smem:[#allocation6 + %s100]]
  %s102 = sshra.s32 %s101, 3
  %s103 = sand.u32 %s101, 7
  %s104 = sshra.s32 %s101, 3
  %s105 = sand.u32 %s101, 7
  %s106 = smul.u32 %s102, 2
  %s107 = smul.u32 %s106, 8
  %s108 = sadd.s32 %s107, %s105
  %s109 = scalar_lea.vmem [#allocation2], %s108
  %v110 = vld [vmem:[%s109] ss:$8 sm:$0x3]
  %s111 = scalar_lea.vmem [#allocation3], 5
  %112 = vst.msk [vmem:[%s111] ss:$8 sm:$0x3] %vm41, %v110
  %113 = vst.msk [vmem:[%s111] ss:$8 sm:$0x0] %vm41, %v110
  %s114 = sadd.s32 0, 6
  %s115 = sld [smem:[#allocation6 + %s114]]
  %s116 = sshra.s32 %s115, 3
  %s117 = sand.u32 %s115, 7
  %s118 = sshra.s32 %s115, 3
  %s119 = sand.u32 %s115, 7
  %s120 = smul.u32 %s116, 2
  %s121 = smul.u32 %s120, 8
  %s122 = sadd.s32 %s121, %s119
  %s123 = scalar_lea.vmem [#allocation2], %s122
  %v124 = vld [vmem:[%s123] ss:$8 sm:$0x3]
  %s125 = scalar_lea.vmem [#allocation3], 6
  %126 = vst.msk [vmem:[%s125] ss:$8 sm:$0x3] %vm41, %v124
  %127 = vst.msk [vmem:[%s125] ss:$8 sm:$0x0] %vm41, %v124
  %s128 = sadd.s32 0, 7
  %s129 = sld [smem:[#allocation6 + %s128]]
  %s130 = sshra.s32 %s129, 3
  %s131 = sand.u32 %s129, 7
  %s132 = sshra.s32 %s129, 3
  %s133 = sand.u32 %s129, 7
  %s134 = smul.u32 %s130, 2
  %s135 = smul.u32 %s134, 8
  %s136 = sadd.s32 %s135, %s133
  %s137 = scalar_lea.vmem [#allocation2], %s136
  %v138 = vld [vmem:[%s137] ss:$8 sm:$0x3]
  %s139 = scalar_lea.vmem [#allocation3], 7
  %140 = vst.msk [vmem:[%s139] ss:$8 sm:$0x3] %vm41, %v138
  %141 = vst.msk [vmem:[%s139] ss:$8 sm:$0x0] %vm41, %v138
  %v142 = vld [vmem:[#allocation3] sm:$0xff]
  %v143 = vld [vmem:[#allocation3 + $0x8] sm:$0xff]
  %s144 = smul.u32 0, 2
  %s145 = smul.addr %s144, 8
  %s146 = scalar_lea.vmem %s2, %s145
  %147 = vst [vmem:[%s146] sm:$0xff] %v142
  %148 = vst [vmem:[%s146 + $0x8] sm:$0xff] %v143
  // Predicated region
  $region6: #{_gather_packed.1} parent=0 // pred_check
    _
  $region7: #{_gather_packed.1} parent=0 // pred_check_branch
    %150 = sbr.rel (0) target = $region9
  $region8: #{_gather_packed.1} parent=0 // pred_region
    _
  $region9: #{_gather_packed.1} parent=0 // pred_fallthru
    _
  // Predicated region
  $region10: #{_gather_packed.1} parent=0 // pred_check
    _
  $region11: #{_gather_packed.1} parent=0 // pred_check_branch
    %152 = sbr.rel (0) target = $region13
  $region12: #{_gather_packed.1} parent=0 // pred_region
    _
  $region13: #{_gather_packed.1} parent=0 // pred_fallthru
    _
  %153 = vsyncmov [#allocation4]
  %s154 = vpop.sfrf %153
  %p155 = scmp.eq.s32.totalorder %s154, 0
  %p156 = pneg %p155
  %158 = shalt.err (%p156)

</llo_original>
